<compile_context>
chip_gen: v6e
topology: v6e:2x2x1
jax: 0.10.0
libtpu: 0.0.40
codegen_flags: <defaults>
</compile_context>

<pallas_src>
import jax
import jax.numpy as jnp
from jax.experimental import pallas as pl
from jax.experimental.pallas import tpu as pltpu


def head_kernel(x_ref, w1_ref, b1_ref, w2_ref, b2_ref, o_ref):
    # x_ref: (tm, d_model); w1_ref: (d_model, 32); b1_ref: (1, 32)
    # w2_ref: (1, 32) row vector; b2_ref: (1, 1); o_ref: (1, tm)  (lane-dense)
    # Layer 1 on the MXU, f32 accumulation; bias + ReLU on the VPU.
    h = jnp.dot(x_ref[...], w1_ref[...], preferred_element_type=jnp.float32)
    h = jnp.maximum(h + b1_ref[...], 0.0)
    # Layer 2 as an NT matmul: (1, 32) contracted with (tm, 32) over the hidden
    # dim -> (1, tm).  This yields the lane-major output block directly (no
    # (tm,1)->(1,tm) relayout); the MXU has huge slack under the x DMA.
    y = jax.lax.dot_general(
        w2_ref[...], h,
        dimension_numbers=(((1,), (1,)), ((), ())),
        preferred_element_type=jnp.float32)
    o_ref[...] = (y + b2_ref[...]).astype(o_ref.dtype)


def head_forward(x, w1, b1, w2, b2, *, target_tile_bytes=4 * 1024 * 1024):
    B, d_model = x.shape
    hidden = w1.shape[1]

    # Byte-targeted row tile: ~4 MiB of x per grid step, multiple of 8 rows;
    # a single grid step (block == full array) when the whole batch is smaller.
    bytes_per_row = d_model * x.dtype.itemsize
    tm = max(8, (target_tile_bytes // bytes_per_row) // 8 * 8)
    if tm >= B:
        tm = B
    n_tiles = pl.cdiv(B, tm)          # ragged last block is clipped by Pallas

    b1_2d = b1.reshape(1, hidden)
    w2_2d = w2.reshape(1, hidden)      # row vector for the NT matmul
    b2_2d = b2.reshape(1, 1)

    out = pl.pallas_call(
        head_kernel,
        out_shape=jax.ShapeDtypeStruct((n_tiles, tm), x.dtype),
        grid_spec=pltpu.PrefetchScalarGridSpec(
            num_scalar_prefetch=0,
            grid=(n_tiles,),
            in_specs=[
                pl.BlockSpec((tm, d_model), lambda i: (i, 0)),
                # Grid-invariant operands: constant index_maps keep them
                # resident in VMEM across all grid steps.
                pl.BlockSpec((d_model, hidden), lambda i: (0, 0)),
                pl.BlockSpec((1, hidden), lambda i: (0, 0)),
                pl.BlockSpec((1, hidden), lambda i: (0, 0)),
                pl.BlockSpec((1, 1), lambda i: (0, 0)),
            ],
            # Lane-dense output block: one contiguous row of the (n_tiles, tm)
            # slab per grid step -> unmasked stores + contiguous writeback DMA.
            out_specs=pl.BlockSpec((1, tm), lambda i: (i, 0)),
        ),
        compiler_params=pltpu.CompilerParams(
            # Batch rows are independent.  On v7x, if profiling shows only one
            # TensorCore engaged, switch this axis to pltpu.CORE_PARALLEL.
            dimension_semantics=("parallel",),
            # 2 x ~4 MiB double-buffered x tiles + (tm,32) h temporaries +
            # ~66 KiB of params fit with large margin; 32 MiB is within every
            # generation's physical VMEM (raises v5e's 16 MiB default).
            vmem_limit_bytes=32 * 1024 * 1024,
        ),
    )(x, w1, b1_2d, w2_2d, b2_2d)

    # (n_tiles, tm) lane-dense slab -> (B, 1); drops the clipped-tail junk rows.
    return out.reshape(-1)[:B].reshape(B, 1)


if __name__ == "__main__":
    d_model = 256
    hidden = 32
    B = 16

    key = jax.random.PRNGKey(0)
    kx, k1, k2, k3, k4 = jax.random.split(key, 5)

    # Deterministic synthetic parameters (PyTorch-style fan_in scaling).
    x = jax.random.normal(kx, (B, d_model), dtype=jnp.float32)
    w1 = jax.random.uniform(k1, (d_model, hidden), jnp.float32,
                            -1.0 / d_model ** 0.5, 1.0 / d_model ** 0.5)
    b1 = jax.random.uniform(k2, (hidden,), jnp.float32,
                            -1.0 / d_model ** 0.5, 1.0 / d_model ** 0.5)
    w2 = jax.random.uniform(k3, (hidden, 1), jnp.float32,
                            -1.0 / hidden ** 0.5, 1.0 / hidden ** 0.5)
    b2 = jax.random.uniform(k4, (1,), jnp.float32,
                            -1.0 / hidden ** 0.5, 1.0 / hidden ** 0.5)

    def ref_fn(xx):
        return jnp.maximum(xx @ w1 + b1, 0.0) @ w2 + b2

    # Small batch: single-grid-step path (block == full array).
    out = jax.block_until_ready(head_forward(x, w1, b1, w2, b2))
    assert out.shape == (B, 1)
    assert jnp.allclose(out, ref_fn(x), atol=1e-5, rtol=1e-5)

    # Larger ragged batch: multi-tile path with a clipped last block (no jnp.pad).
    B2 = 5000
    x2 = jax.random.normal(jax.random.PRNGKey(1), (B2, d_model), dtype=jnp.float32)
    out2 = jax.block_until_ready(head_forward(x2, w1, b1, w2, b2))
    assert out2.shape == (B2, 1)
    assert jnp.allclose(out2, ref_fn(x2), atol=1e-5, rtol=1e-5)

    print("KERNEL_OK")
</pallas_src>

<mosaic_0001>
module attributes {stable_mosaic.version = 11 : i64} {
  func.func @head_kernel(%arg0: i32, %arg1: memref<16x256xf32, #tpu.memory_space<vmem>>, %arg2: memref<256x32xf32, #tpu.memory_space<vmem>>, %arg3: memref<1x32xf32, #tpu.memory_space<vmem>>, %arg4: memref<1x32xf32, #tpu.memory_space<vmem>>, %arg5: memref<1x1xf32, #tpu.memory_space<vmem>>, %arg6: memref<1x16xf32, #tpu.memory_space<vmem>>) attributes {dimension_semantics = [#tpu.dimension_semantics<parallel>], iteration_bounds = array<i64: 1>, scalar_prefetch = 0 : i64, scratch_operands = 0 : i64, tpu.core_type = #tpu.core_type<tc>, window_params = [{transform_indices = @transform_0, window_bounds = array<i64: 16, 256>}, {pipeline_mode = #tpu.pipeline_mode<synchronous>, transform_indices = @transform_1, window_bounds = array<i64: 256, 32>}, {pipeline_mode = #tpu.pipeline_mode<synchronous>, transform_indices = @transform_2, window_bounds = array<i64: 1, 32>}, {pipeline_mode = #tpu.pipeline_mode<synchronous>, transform_indices = @transform_3, window_bounds = array<i64: 1, 32>}, {pipeline_mode = #tpu.pipeline_mode<synchronous>, transform_indices = @transform_4, window_bounds = array<i64: 1, 1>}, {transform_indices = @transform_5, window_bounds = array<i64: 1, 16>}]} {
    %c0 = arith.constant 0 : index
    %c0_0 = arith.constant 0 : index
    %0 = vector.load %arg1[%c0, %c0_0] : memref<16x256xf32, #tpu.memory_space<vmem>>, vector<16x256xf32>
    %c0_1 = arith.constant 0 : index
    %c0_2 = arith.constant 0 : index
    %1 = vector.load %arg2[%c0_1, %c0_2] : memref<256x32xf32, #tpu.memory_space<vmem>>, vector<256x32xf32>
    %cst = arith.constant dense<0.000000e+00> : vector<16x32xf32>
    %2 = tpu.matmul %0, %1, %cst {dimension_numbers = #tpu.dot_dimension_numbers<[1], [0], [0], [1], [0, 0, 1, 1], [], []>} : vector<16x256xf32>, vector<256x32xf32>, vector<16x32xf32> -> vector<16x32xf32>
    %c0_3 = arith.constant 0 : index
    %c0_4 = arith.constant 0 : index
    %3 = vector.load %arg3[%c0_3, %c0_4] : memref<1x32xf32, #tpu.memory_space<vmem>>, vector<1x32xf32>
    %4 = vector.broadcast %3 : vector<1x32xf32> to vector<16x32xf32>
    %5 = arith.addf %2, %4 : vector<16x32xf32>
    %cst_5 = arith.constant 0.000000e+00 : f32
    %6 = vector.broadcast %cst_5 : f32 to vector<16x32xf32>
    %7 = arith.maximumf %5, %6 : vector<16x32xf32>
    %c0_6 = arith.constant 0 : index
    %c0_7 = arith.constant 0 : index
    %8 = vector.load %arg4[%c0_6, %c0_7] : memref<1x32xf32, #tpu.memory_space<vmem>>, vector<1x32xf32>
    %cst_8 = arith.constant dense<0.000000e+00> : vector<1x16xf32>
    %9 = tpu.matmul %8, %7, %cst_8 {dimension_numbers = #tpu.dot_dimension_numbers<[1], [1], [0], [0], [0, 0, 1, 0], [], []>} : vector<1x32xf32>, vector<16x32xf32>, vector<1x16xf32> -> vector<1x16xf32>
    %c0_9 = arith.constant 0 : index
    %c0_10 = arith.constant 0 : index
    %10 = vector.load %arg5[%c0_9, %c0_10] : memref<1x1xf32, #tpu.memory_space<vmem>>, vector<1x1xf32>
    %11 = vector.broadcast %10 : vector<1x1xf32> to vector<1x16xf32>
    %12 = arith.addf %9, %11 : vector<1x16xf32>
    %c0_11 = arith.constant 0 : index
    %c0_12 = arith.constant 0 : index
    %13 = vector.load %arg6[%c0_11, %c0_12] : memref<1x16xf32, #tpu.memory_space<vmem>>, vector<1x16xf32>
    tpu.vector_store %arg6[%c0_11, %c0_12], %12 {strides = array<i32>} : memref<1x16xf32, #tpu.memory_space<vmem>>, vector<1x16xf32>,
    return
  }
  func.func @transform_0(%arg0: i32) -> (i32, i32) {
    %c0_i32 = arith.constant 0 : i32
    %c0_i32_0 = arith.constant 0 : i32
    return %arg0, %c0_i32 : i32, i32
  }
  func.func @transform_1(%arg0: i32) -> (i32, i32) {
    %c0_i32 = arith.constant 0 : i32
    %c0_i32_0 = arith.constant 0 : i32
    %c0_i32_1 = arith.constant 0 : i32
    return %c0_i32, %c0_i32_0 : i32, i32
  }
  func.func @transform_2(%arg0: i32) -> (i32, i32) {
    %c0_i32 = arith.constant 0 : i32
    %c0_i32_0 = arith.constant 0 : i32
    %c0_i32_1 = arith.constant 0 : i32
    return %c0_i32, %c0_i32_0 : i32, i32
  }
  func.func @transform_3(%arg0: i32) -> (i32, i32) {
    %c0_i32 = arith.constant 0 : i32
    %c0_i32_0 = arith.constant 0 : i32
    %c0_i32_1 = arith.constant 0 : i32
    return %c0_i32, %c0_i32_0 : i32, i32
  }
  func.func @transform_4(%arg0: i32) -> (i32, i32) {
    %c0_i32 = arith.constant 0 : i32
    %c0_i32_0 = arith.constant 0 : i32
    %c0_i32_1 = arith.constant 0 : i32
    return %c0_i32, %c0_i32_0 : i32, i32
  }
  func.func @transform_5(%arg0: i32) -> (i32, i32) {
    %c0_i32 = arith.constant 0 : i32
    %c0_i32_0 = arith.constant 0 : i32
    return %arg0, %c0_i32 : i32, i32
  }
}

</mosaic_0001>

<llo_original>
// kernel: tpu_custom_call.1
$region0: #{tpu_custom_call.1}
  #allocation0 [shape = 'u32[]', space=smem, size = 0x4, offset = 0x4, fixed_abs, tag = 'smem constant byte address 0x4 - core index']
  #allocation1 [shape = 'u32[144,128]{1,0:T(1,128)}', space=vmem, size = 0x12000, scoped, tag = 'internal scratch']
  #allocation2 [shape = 'f32[1,1]{1,0:T(1,128)S(1)}', space=vmem, size = 0x200, scoped, tag = 'scoped memory for tpu_custom_call.1']
  %s0 = inlined_call_operand.vmem [shape: f32[16,256], index: 0, kind: input, shape index: {}]
  %s1 = inlined_call_operand.vmem [shape: f32[256,32], index: 1, kind: input, shape index: {}]
  %s2 = inlined_call_operand.vmem [shape: f32[1,32], index: 2, kind: input, shape index: {}]
  %s3 = inlined_call_operand.vmem [shape: f32[1,32], index: 3, kind: input, shape index: {}]
  %s4 = inlined_call_operand.<no memory space> [shape: f32[1,1], index: 4, kind: input, shape index: {}]
  %s5 = inlined_call_operand.hbm [shape: f32[1,16], index: 5, kind: output, shape index: {}]
  %s6 = sld [smem:[#allocation0]]
  $region30: #{tpu_custom_call.1} parent=0
    _
  %s8 = ssub.s32 1, %s6
  %s9 = scalar_select 0, %s8, %s6
  %v10 = vstv %s4
  %11 = vst [vmem:[#allocation2] sm:$0x1] %v10
  $region1: #{tpu_custom_call.1} parent=0
    #allocation3 [shape = 'u8[512]{0}', space=vmem, size = 0x400, scoped, tag = 'output window, operand 0, single buffered']
    #allocation4 [shape = 's32[1]{0}', space=sflag, size = 0x4, scoped, tag = 'scoped memory for tpu_custom_call.1']
    %12 = vsyncpa [#allocation4], 0
    // Predicated region
    $region2: #{tpu_custom_call.1} parent=1 // pred_check
      _
    $region3: #{tpu_custom_call.1} parent=1 // pred_check_branch
      %14 = sbr.rel (0) target = $region5
    $region4: #{tpu_custom_call.1} parent=1 // pred_region
      _
    $region5: #{tpu_custom_call.1} parent=1 // pred_fallthru
      _
    // Predicated region
    $region6: #{tpu_custom_call.1} parent=1 // pred_check
      _
    $region7: #{tpu_custom_call.1} parent=1 // pred_check_branch
      %16 = sbr.rel (0) target = $region9
    $region8: #{tpu_custom_call.1} parent=1 // pred_region
      _
    $region9: #{tpu_custom_call.1} parent=1 // pred_fallthru
      _
    // Predicated region
    $region10: #{tpu_custom_call.1} parent=1 // pred_check
      _
    $region11: #{tpu_custom_call.1} parent=1 // pred_check_branch
      %18 = sbr.rel (0) target = $region13
    $region12: #{tpu_custom_call.1} parent=1 // pred_region
      _
    $region13: #{tpu_custom_call.1} parent=1 // pred_fallthru
      _
    // Predicated region
    $region14: #{tpu_custom_call.1} parent=1 // pred_check
      _
    $region15: #{tpu_custom_call.1} parent=1 // pred_check_branch
      %20 = sbr.rel (0) target = $region17
    $region16: #{tpu_custom_call.1} parent=1 // pred_region
      _
    $region17: #{tpu_custom_call.1} parent=1 // pred_fallthru
      _
    // Predicated region
    $region18: #{tpu_custom_call.1} parent=1 // pred_check
      _
    $region19: #{tpu_custom_call.1} parent=1 // pred_check_branch
      %22 = sbr.rel (0) target = $region21
    $region20: #{tpu_custom_call.1} parent=1 // pred_region
      _
    $region21: #{tpu_custom_call.1} parent=1 // pred_fallthru
      _
    %v23 = vld [vmem:[%s0] sm:$0xff]
    %v24 = vld [vmem:[%s0 + $0x8] sm:$0xff]
    %v25 = vld [vmem:[%s0 + $0x10] sm:$0xff]
    %v26 = vld [vmem:[%s0 + $0x18] sm:$0xff]
    %v27 = vld [vmem:[%s1] sm:$0xff]
    %v28 = vld [vmem:[%s1 + $0x8] sm:$0xff]
    %v29 = vld [vmem:[%s1 + $0x10] sm:$0xff]
    %v30 = vld [vmem:[%s1 + $0x18] sm:$0xff]
    %v31 = vld [vmem:[%s1 + $0x20] sm:$0xff]
    %v32 = vld [vmem:[%s1 + $0x28] sm:$0xff]
    %v33 = vld [vmem:[%s1 + $0x30] sm:$0xff]
    %v34 = vld [vmem:[%s1 + $0x38] sm:$0xff]
    %v35 = vld [vmem:[%s1 + $0x40] sm:$0xff]
    %v36 = vld [vmem:[%s1 + $0x48] sm:$0xff]
    %v37 = vld [vmem:[%s1 + $0x50] sm:$0xff]
    %v38 = vld [vmem:[%s1 + $0x58] sm:$0xff]
    %v39 = vld [vmem:[%s1 + $0x60] sm:$0xff]
    %v40 = vld [vmem:[%s1 + $0x68] sm:$0xff]
    %v41 = vld [vmem:[%s1 + $0x70] sm:$0xff]
    %v42 = vld [vmem:[%s1 + $0x78] sm:$0xff]
    %v43 = vld [vmem:[%s1 + $0x80] sm:$0xff]
    %v44 = vld [vmem:[%s1 + $0x88] sm:$0xff]
    %v45 = vld [vmem:[%s1 + $0x90] sm:$0xff]
    %v46 = vld [vmem:[%s1 + $0x98] sm:$0xff]
    %v47 = vld [vmem:[%s1 + $0xa0] sm:$0xff]
    %v48 = vld [vmem:[%s1 + $0xa8] sm:$0xff]
    %v49 = vld [vmem:[%s1 + $0xb0] sm:$0xff]
    %v50 = vld [vmem:[%s1 + $0xb8] sm:$0xff]
    %v51 = vld [vmem:[%s1 + $0xc0] sm:$0xff]
    %v52 = vld [vmem:[%s1 + $0xc8] sm:$0xff]
    %v53 = vld [vmem:[%s1 + $0xd0] sm:$0xff]
    %v54 = vld [vmem:[%s1 + $0xd8] sm:$0xff]
    %v55 = vld [vmem:[%s1 + $0xe0] sm:$0xff]
    %v56 = vld [vmem:[%s1 + $0xe8] sm:$0xff]
    %v57 = vld [vmem:[%s1 + $0xf0] sm:$0xff]
    %v58 = vld [vmem:[%s1 + $0xf8] sm:$0xff]
    %v59 = vld [vmem:[%s2] sm:$0x1]
    %v61 = vlaneseq
    %v62 = vshrl.u32 %v61, 7
    %v63 = vsub.s32 0, %v62
    %v64 = vrot.slane %v59, %v63
    %66 = vmatprep.subr.mxu0 0.0
    %67 = vmatpush1.msra.mxu0 %v42
    %68 = vmatprep.subr.mxu0 0.0
    %69 = vmatpush1.msra.mxu0 %v41
    %70 = vmatprep.subr.mxu0 0.0
    %71 = vmatpush1.msra.mxu0 %v40
    %72 = vmatprep.subr.mxu0 0.0
    %73 = vmatpush1.msra.mxu0 %v39
    %74 = vmatprep.subr.mxu0 0.0
    %75 = vmatpush1.msra.mxu0 %v38
    %76 = vmatprep.subr.mxu0 0.0
    %77 = vmatpush1.msra.mxu0 %v37
    %78 = vmatprep.subr.mxu0 0.0
    %79 = vmatpush1.msra.mxu0 %v36
    %80 = vmatprep.subr.mxu0 0.0
    %81 = vmatpush1.msra.mxu0 %v35
    %82 = vmatprep.subr.mxu0 0.0
    %83 = vmatpush1.msra.mxu0 %v34
    %84 = vmatprep.subr.mxu0 0.0
    %85 = vmatpush1.msra.mxu0 %v33
    %86 = vmatprep.subr.mxu0 0.0
    %87 = vmatpush1.msra.mxu0 %v32
    %88 = vmatprep.subr.mxu0 0.0
    %89 = vmatpush1.msra.mxu0 %v31
    %90 = vmatprep.subr.mxu0 0.0
    %91 = vmatpush1.msra.mxu0 %v30
    %92 = vmatprep.subr.mxu0 0.0
    %93 = vmatpush1.msra.mxu0 %v29
    %94 = vmatprep.subr.mxu0 0.0
    %95 = vmatpush1.msra.mxu0 %v28
    %96 = vmatprep.subr.mxu0 0.0
    %97 = vmatpush1.msra.mxu0 %v27
    %98 = vmatprep.subr.mxu0 0.0
    %99 = vmatpush2.msra.mxu0 %v58
    %100 = vmatprep.subr.mxu0 0.0
    %101 = vmatpush2.msra.mxu0 %v57
    %102 = vmatprep.subr.mxu0 0.0
    %103 = vmatpush2.msra.mxu0 %v56
    %104 = vmatprep.subr.mxu0 0.0
    %105 = vmatpush2.msra.mxu0 %v55
    %106 = vmatprep.subr.mxu0 0.0
    %107 = vmatpush2.msra.mxu0 %v54
    %108 = vmatprep.subr.mxu0 0.0
    %109 = vmatpush2.msra.mxu0 %v53
    %110 = vmatprep.subr.mxu0 0.0
    %111 = vmatpush2.msra.mxu0 %v52
    %112 = vmatprep.subr.mxu0 0.0
    %113 = vmatpush2.msra.mxu0 %v51
    %114 = vmatprep.subr.mxu0 0.0
    %115 = vmatpush2.msra.mxu0 %v50
    %116 = vmatprep.subr.mxu0 0.0
    %117 = vmatpush2.msra.mxu0 %v49
    %118 = vmatprep.subr.mxu0 0.0
    %119 = vmatpush2.msra.mxu0 %v48
    %120 = vmatprep.subr.mxu0 0.0
    %121 = vmatpush2.msra.mxu0 %v47
    %122 = vmatprep.subr.mxu0 0.0
    %123 = vmatpush2.msra.mxu0 %v46
    %124 = vmatprep.subr.mxu0 0.0
    %125 = vmatpush2.msra.mxu0 %v45
    %126 = vmatprep.subr.mxu0 0.0
    %127 = vmatpush2.msra.mxu0 %v44
    %128 = vmatprep.subr.mxu0 0.0
    %129 = vmatpush2.msra.mxu0 %v43
    %130 = vmatprep.mubr.f32.mxu0 %v24
    %131 = vmatmul.mubr.f32.gmra.mxu0 %v23
    %v132 = vpop.f32.mrf.mxu0
    %v133 = vadd.f32 %v64, %v132
    %v134 = vpop.f32.mrf.mxu0
    %135 = vmatprep.mubr.f32.mxu0 %v26
    %136 = vmatmul.mubr.f32.gmra.mxu0 %v25
    %v137 = vpop.f32.mrf.mxu0
    %v138 = vadd.f32 %v64, %v137
    %v139 = vpop.f32.mrf.mxu0
    %140 = vdwg.mxu0
    %v141 = vmax.f32 %v133, 0.0
    %v142 = vmax.f32 %v138, 0.0
    %v143 = vld [vmem:[%s3] sm:$0x1]
    %v144 = vld [vmem:[#allocation2] sm:$0x1]
    %146 = vset.pattern.permute.xlu0 0
    %147 = vperm.xlu0 %146, %v144
    %v148 = vpop.permute.xlu0 %147
    %v150 = vlaneseq
    %v151 = vshrl.u32 %v150, 7
    %v152 = vsub.s32 0, %v151
    %v153 = vrot.slane %v148, %v152
    %vm154 = vcmask 261120
    %v156 = vsel %vm154, %v143, 0
    %v159 = vsel %vm154, %v141, 0
    %v162 = vsel %vm154, %v142, 0
    %164 = vmatprep.subr.mxu0 0.0
    %165 = vmatpush1.xpose.msra.mxu0 0.0
    %166 = vmatprep.subr.mxu0 0.0
    %167 = vmatpush1.xpose.msra.mxu0 0.0
    %168 = vmatprep.subr.mxu0 0.0
    %169 = vmatpush1.xpose.msra.mxu0 0.0
    %170 = vmatprep.subr.mxu0 0.0
    %171 = vmatpush1.xpose.msra.mxu0 0.0
    %172 = vmatprep.subr.mxu0 0.0
    %173 = vmatpush1.xpose.msra.mxu0 0.0
    %174 = vmatprep.subr.mxu0 0.0
    %175 = vmatpush1.xpose.msra.mxu0 0.0
    %176 = vmatprep.subr.mxu0 0.0
    %177 = vmatpush1.xpose.msra.mxu0 0.0
    %178 = vmatprep.subr.mxu0 0.0
    %179 = vmatpush1.xpose.msra.mxu0 0.0
    %180 = vmatprep.subr.mxu0 0.0
    %181 = vmatpush1.xpose.msra.mxu0 0.0
    %182 = vmatprep.subr.mxu0 0.0
    %183 = vmatpush1.xpose.msra.mxu0 0.0
    %184 = vmatprep.subr.mxu0 0.0
    %185 = vmatpush1.xpose.msra.mxu0 0.0
    %186 = vmatprep.subr.mxu0 0.0
    %187 = vmatpush1.xpose.msra.mxu0 0.0
    %188 = vmatprep.subr.mxu0 0.0
    %189 = vmatpush1.xpose.msra.mxu0 0.0
    %190 = vmatprep.subr.mxu0 0.0
    %191 = vmatpush1.xpose.msra.mxu0 0.0
    %192 = vmatprep.subr.mxu0 0.0
    %193 = vmatpush1.xpose.msra.mxu0 %v162
    %194 = vmatprep.subr.mxu0 0.0
    %195 = vmatpush1.xpose.msra.mxu0 %v159
    %196 = vmatprep.subr.mxu0 0.0
    %197 = vmatpush2.xpose.msra.mxu0 0.0
    %198 = vmatprep.subr.mxu0 0.0
    %199 = vmatpush2.xpose.msra.mxu0 0.0
    %200 = vmatprep.subr.mxu0 0.0
    %201 = vmatpush2.xpose.msra.mxu0 0.0
    %202 = vmatprep.subr.mxu0 0.0
    %203 = vmatpush2.xpose.msra.mxu0 0.0
    %204 = vmatprep.subr.mxu0 0.0
    %205 = vmatpush2.xpose.msra.mxu0 0.0
    %206 = vmatprep.subr.mxu0 0.0
    %207 = vmatpush2.xpose.msra.mxu0 0.0
    %208 = vmatprep.subr.mxu0 0.0
    %209 = vmatpush2.xpose.msra.mxu0 0.0
    %210 = vmatprep.subr.mxu0 0.0
    %211 = vmatpush2.xpose.msra.mxu0 0.0
    %212 = vmatprep.subr.mxu0 0.0
    %213 = vmatpush2.xpose.msra.mxu0 0.0
    %214 = vmatprep.subr.mxu0 0.0
    %215 = vmatpush2.xpose.msra.mxu0 0.0
    %216 = vmatprep.subr.mxu0 0.0
    %217 = vmatpush2.xpose.msra.mxu0 0.0
    %218 = vmatprep.subr.mxu0 0.0
    %219 = vmatpush2.xpose.msra.mxu0 0.0
    %220 = vmatprep.subr.mxu0 0.0
    %221 = vmatpush2.xpose.msra.mxu0 0.0
    %222 = vmatprep.subr.mxu0 0.0
    %223 = vmatpush2.xpose.msra.mxu0 0.0
    %224 = vmatprep.subr.mxu0 0.0
    %225 = vmatpush2.xpose.msra.mxu0 0.0
    %226 = vmatprep.subr.mxu0 0.0
    %227 = vmatpush2.xpose.msra.mxu0 0.0
    %228 = vmatprep.mubr.f32.mxu0 0.0
    %229 = vmatmul.mubr.f32.gmra.mxu0 %v156
    %v230 = vpop.f32.mrf.mxu0
    %v231 = vadd.f32 %v153, %v230
    %v232 = vpop.f32.mrf.mxu0
    %233 = vdwg.mxu0
    %vm234 = vcmask 122880
    %235 = vst.msk [vmem:[#allocation3] sm:$0x1] %vm234, %v231
    // Predicated region
    $region22: #{tpu_custom_call.1} parent=1 // pred_check
      _
    $region23: #{tpu_custom_call.1} parent=1 // pred_check_branch
      %237 = sbr.rel (0) target = $region25
    $region24: #{tpu_custom_call.1} parent=1 // pred_region
      %s239 = ssub.s32 16, 16
      %240 = vsyncadd [#allocation4], %s239
      %s242 = sshll.u32 [#allocation3], 4
      %s243 = int_to_ptr.vmem [resolvable:$true] %s242
      %245 = dma.vmem_to_hbm [thread:$0]  %s243, 16, %s5, [#allocation4]
    $region25: #{tpu_custom_call.1} parent=1 // pred_fallthru
      _
    // Predicated region
    $region26: #{tpu_custom_call.1} parent=1 // pred_check
      _
    $region27: #{tpu_custom_call.1} parent=1 // pred_check_branch
      %247 = sbr.rel (0) target = $region29
    $region28: #{tpu_custom_call.1} parent=1 // pred_region
      %248 = dma.done [#allocation4], 16
    $region29: #{tpu_custom_call.1} parent=1 // pred_fallthru
      _
    %249 = vsyncpa [#allocation4], 1

</llo_original>
